<compile_context>
chip_gen: v6e
topology: v6e:2x2x1
jax: 0.10.0
libtpu: 0.0.40
codegen_flags: <defaults>
</compile_context>

<pallas_src>
import jax
import jax.numpy as jnp
from jax.experimental import pallas as pl
from jax.experimental.pallas import tpu as pltpu

LANES = 128     # lane tile: batch lives on lanes
SUBLANES = 8    # f32 sublane tile: hidden lives on sublanes


def _round_up(v, m):
    return -(-v // m) * m


# ---------------------------------------------------------------------------
# One-time packing / padding (kept OUT of the per-call path, per review).
# ---------------------------------------------------------------------------

def pack_params(w1, b1, w2, b2):
    """Pack PyTorch-layout params into a single (H_pad, 4) f32 slab.

    Columns: [w1 | b1 | w2^T | b2 (row 0, rest zero)].
      w1: (H, 1)  hidden.weight    b1: (H,)  hidden.bias
      w2: (1, H)  predict.weight   b2: (1,)  predict.bias
    Zero padding of the hidden rows is mathematically inert.
    """
    h = w1.shape[0]
    h_pad = _round_up(h, SUBLANES)
    b2_col = jnp.zeros((h, 1), w1.dtype).at[0, 0].set(b2[0])
    slab = jnp.concatenate([w1, b1[:, None], w2.T, b2_col], axis=1)   # (H, 4)
    return jnp.pad(slab, ((0, h_pad - h), (0, 0)))                    # (H_pad, 4)


def unpack_params(slab, h):
    w1 = slab[:h, 0:1]              # (H, 1)
    b1 = slab[:h, 1]                # (H,)
    w2 = slab[:h, 2][None, :]       # (1, H)
    b2 = slab[0:1, 3]               # (1,)
    return w1, b1, w2, b2


def pad_batch(x):
    """(N, 1) column -> lane-major (1, N_pad) row (pad once, reuse every call)."""
    n = x.shape[0]
    n_pad = _round_up(n, LANES)
    return jnp.pad(x[:, 0][None, :], ((0, 0), (0, n_pad - n)))


# ---------------------------------------------------------------------------
# Forward kernel (the nn.Module's forward): 2 input DMAs, 1 lane-dense output.
# ---------------------------------------------------------------------------

def mlp_fwd_kernel(x_ref, p_ref, o_ref):
    # x_ref: (1, N_pad) batch-on-lanes. p_ref: (H_pad, 4) packed params.
    # o_ref: (1, N_pad) lane-dense output row.
    x = x_ref[...]                                     # (1, N_pad)
    p = p_ref[...]                                     # (H_pad, 4)
    w1, b1, w2 = p[:, 0:1], p[:, 1:2], p[:, 2:3]       # (H_pad, 1) columns
    b2 = p[0:1, 3:4]                                   # (1, 1)
    # Layer 1: rank-1 outer product + bias + ReLU — pure VPU (no MXU round-trip).
    h = jnp.maximum(w1 * x + b1, 0.0)                  # (H_pad, N_pad)
    # Layer 2: single-output GEMV — VPU multiply + XLU sublane reduce.
    # TODO(synk): once H >= 128, use the MXU instead:
    #   y = jnp.dot(w2.reshape(1,-1), h, preferred_element_type=jnp.float32)
    y = jnp.sum(h * w2, axis=0, keepdims=True) + b2    # (1, N_pad)
    o_ref[...] = y.astype(o_ref.dtype)


def mlp_forward(x_row, param_slab):
    """Forward on pre-padded operands: (1, N_pad), (H_pad, 4) -> (1, N_pad)."""
    vmem = pl.BlockSpec(memory_space=pltpu.VMEM)
    return pl.pallas_call(
        mlp_fwd_kernel,
        out_shape=jax.ShapeDtypeStruct(x_row.shape, x_row.dtype),
        in_specs=[vmem, vmem],
        out_specs=vmem,
    )(x_row, param_slab)


def net_forward(x, w1, b1, w2, b2):
    """Drop-in (N,1)->(N,1) forward matching the PyTorch module.  (Pads per
    call for convenience; in a loop, prefer mlp_forward on pre-packed args.)"""
    n = x.shape[0]
    y_row = mlp_forward(pad_batch(x), pack_params(w1, b1, w2, b2))
    return y_row[0, :n][:, None]


# ---------------------------------------------------------------------------
# Fused training kernel: K steps of (forward + MSE backward + SGD) per call.
# ---------------------------------------------------------------------------

def make_train_kernel(n_valid, n_steps, lr):
    inv_n = 1.0 / float(n_valid)
    lr = float(lr)

    def train_kernel(x_ref, t_ref, p_ref, p_out_ref):
        x = x_ref[...]                                   # (1, N_pad)
        t = t_ref[...]                                   # (1, N_pad)
        n_pad = x.shape[1]
        # Padded batch lanes must not contribute to the gradients.
        lane = jax.lax.broadcasted_iota(jnp.int32, (1, n_pad), 1)
        valid = (lane < n_valid).astype(x.dtype)         # (1, N_pad)

        p = p_ref[...]                                   # (H_pad, 4)
        carry0 = (p[:, 0:1], p[:, 1:2], p[:, 2:3], p[0:1, 3:4])

        def sgd_step(_, carry):
            w1, b1, w2, b2 = carry
            # ---- forward (same math as mlp_fwd_kernel) ----
            z1 = w1 * x + b1                             # (H_pad, N_pad)
            act = (z1 > 0.0).astype(x.dtype)             # ReLU mask (reused bwd)
            h = z1 * act
            y = jnp.sum(h * w2, axis=0, keepdims=True) + b2    # (1, N_pad)
            # ---- backward of MSE (mean over the N valid batch elements) ----
            dy = (2.0 * inv_n) * (y - t) * valid         # (1, N_pad)
            db2 = jnp.sum(dy, axis=1, keepdims=True)             # (1, 1)
            dw2 = jnp.sum(h * dy, axis=1, keepdims=True)         # (H_pad, 1)
            dz1 = (w2 * dy) * act                                # (H_pad, N_pad)
            db1 = jnp.sum(dz1, axis=1, keepdims=True)            # (H_pad, 1)
            dw1 = jnp.sum(dz1 * x, axis=1, keepdims=True)        # (H_pad, 1)
            # ---- SGD update ----
            return (w1 - lr * dw1, b1 - lr * db1, w2 - lr * dw2, b2 - lr * db2)

        w1, b1, w2, b2 = jax.lax.fori_loop(0, n_steps, sgd_step, carry0)

        p_out_ref[:, 0:1] = w1
        p_out_ref[:, 1:2] = b1
        p_out_ref[:, 2:3] = w2
        # Only row 0 of column 3 is meaningful; broadcasting keeps the store dense.
        p_out_ref[:, 3:4] = jnp.broadcast_to(b2, w1.shape)

    return train_kernel


def mlp_train(x_row, t_row, param_slab, *, n_valid, n_steps, lr):
    """Run n_steps of full-batch SGD (fwd + bwd + update) in ONE pallas_call.
    The param slab is aliased input->output (donated), so do not reuse the
    array passed as `param_slab` afterwards."""
    vmem = pl.BlockSpec(memory_space=pltpu.VMEM)
    kernel = make_train_kernel(n_valid=n_valid, n_steps=n_steps, lr=lr)
    return pl.pallas_call(
        kernel,
        out_shape=jax.ShapeDtypeStruct(param_slab.shape, param_slab.dtype),
        in_specs=[vmem, vmem, vmem],
        out_specs=vmem,
        input_output_aliases={2: 0},     # P8: params updated in place
    )(x_row, t_row, param_slab)


# ---------------------------------------------------------------------------
# Init mirroring torch.nn.Linear defaults (U(-1/sqrt(fan_in), 1/sqrt(fan_in))).
# ---------------------------------------------------------------------------

def init_params(key, n_features, n_hiddens, n_outputs, dtype=jnp.float32):
    k1, k2, k3, k4 = jax.random.split(key, 4)
    bound1 = 1.0 / (n_features ** 0.5)
    bound2 = 1.0 / (n_hiddens ** 0.5)
    w1 = jax.random.uniform(k1, (n_hiddens, n_features), dtype, -bound1, bound1)
    b1 = jax.random.uniform(k2, (n_hiddens,), dtype, -bound1, bound1)
    w2 = jax.random.uniform(k3, (n_outputs, n_hiddens), dtype, -bound2, bound2)
    b2 = jax.random.uniform(k4, (n_outputs,), dtype, -bound2, bound2)
    return w1, b1, w2, b2


if __name__ == "__main__":
    # Shapes implied by the original script: x = linspace(-1, 1, 100).unsqueeze(1)
    N, F_IN, H, O = 100, 1, 32, 1
    LR, STEPS = 0.05, 20

    key = jax.random.PRNGKey(0)
    kp, kn = jax.random.split(key)
    x = jnp.expand_dims(jnp.linspace(-1.0, 1.0, N, dtype=jnp.float32), axis=1)   # (100, 1)
    t = x ** 2 + 0.1 * jax.random.normal(kn, x.shape, dtype=jnp.float32)          # (100, 1)
    w1, b1, w2, b2 = init_params(kp, F_IN, H, O)

    # One-time packing / padding (outside the hot path).
    x_row = pad_batch(x)                        # (1, 128)
    t_row = pad_batch(t)                        # (1, 128)
    slab = pack_params(w1, b1, w2, b2)          # (32, 4)

    # ---- forward kernel vs plain-JAX reference (the module's forward) ----
    y_row = mlp_forward(x_row, slab)
    jax.block_until_ready(y_row)
    y = y_row[0, :N][:, None]
    with jax.default_matmul_precision("highest"):
        y_ref = jnp.maximum(x @ w1.T + b1[None, :], 0.0) @ w2.T + b2[None, :]
    assert y.shape == (N, O)
    assert jnp.allclose(y, y_ref, atol=1e-5, rtol=1e-5)

    # ---- fused K-step training kernel vs pure-JAX SGD reference ----
    slab_train = pack_params(w1, b1, w2, b2)    # fresh copy: input is donated
    trained = mlp_train(x_row, t_row, slab_train, n_valid=N, n_steps=STEPS, lr=LR)
    jax.block_until_ready(trained)
    tw1, tb1, tw2, tb2 = unpack_params(trained, H)

    with jax.default_matmul_precision("highest"):
        def loss_fn(params):
            pw1, pb1, pw2, pb2 = params
            yy = jnp.maximum(x @ pw1.T + pb1[None, :], 0.0) @ pw2.T + pb2[None, :]
            return jnp.mean((yy - t) ** 2)

        ref_params = (w1, b1, w2, b2)
        for _ in range(STEPS):
            grads = jax.grad(loss_fn)(ref_params)
            ref_params = tuple(p - LR * g for p, g in zip(ref_params, grads))
        ref_loss = loss_fn(ref_params)
        pallas_loss = loss_fn((tw1, tb1, tw2, tb2))

    rw1, rb1, rw2, rb2 = ref_params
    assert jnp.allclose(tw1, rw1, atol=1e-3, rtol=1e-2)
    assert jnp.allclose(tb1, rb1, atol=1e-3, rtol=1e-2)
    assert jnp.allclose(tw2, rw2, atol=1e-3, rtol=1e-2)
    assert jnp.allclose(tb2, rb2, atol=1e-3, rtol=1e-2)
    assert jnp.allclose(pallas_loss, ref_loss, atol=1e-4, rtol=1e-2)

    print("KERNEL_OK")
</pallas_src>

<mosaic_0001>
module attributes {stable_mosaic.version = 11 : i64} {
  func.func @mlp_fwd_kernel(%arg0: memref<1x128xf32, #tpu.memory_space<vmem>>, %arg1: memref<32x4xf32, #tpu.memory_space<vmem>>, %arg2: memref<1x128xf32, #tpu.memory_space<vmem>>) attributes {dimension_semantics = [], scalar_prefetch = 0 : i64, scratch_operands = 0 : i64, tpu.core_type = #tpu.core_type<tc>} {
    %c0 = arith.constant 0 : index
    %c0_0 = arith.constant 0 : index
    %0 = vector.load %arg0[%c0, %c0_0] : memref<1x128xf32, #tpu.memory_space<vmem>>, vector<1x128xf32>
    %c0_1 = arith.constant 0 : index
    %c0_2 = arith.constant 0 : index
    %1 = vector.load %arg1[%c0_1, %c0_2] : memref<32x4xf32, #tpu.memory_space<vmem>>, vector<32x4xf32>
    %2 = vector.extract_strided_slice %1 {offsets = [0, 0], sizes = [32, 1], strides = [1, 1]} : vector<32x4xf32> to vector<32x1xf32>
    %3 = vector.extract_strided_slice %1 {offsets = [0, 1], sizes = [32, 1], strides = [1, 1]} : vector<32x4xf32> to vector<32x1xf32>
    %4 = vector.extract_strided_slice %1 {offsets = [0, 2], sizes = [32, 1], strides = [1, 1]} : vector<32x4xf32> to vector<32x1xf32>
    %5 = vector.extract_strided_slice %1 {offsets = [0, 3], sizes = [1, 1], strides = [1, 1]} : vector<32x4xf32> to vector<1x1xf32>
    %6 = vector.broadcast %2 : vector<32x1xf32> to vector<32x128xf32>
    %7 = vector.broadcast %0 : vector<1x128xf32> to vector<32x128xf32>
    %8 = arith.mulf %6, %7 : vector<32x128xf32>
    %9 = vector.broadcast %3 : vector<32x1xf32> to vector<32x128xf32>
    %10 = arith.addf %8, %9 : vector<32x128xf32>
    %cst = arith.constant 0.000000e+00 : f32
    %11 = vector.broadcast %cst : f32 to vector<32x128xf32>
    %12 = arith.maximumf %10, %11 : vector<32x128xf32>
    %13 = vector.broadcast %4 : vector<32x1xf32> to vector<32x128xf32>
    %14 = arith.mulf %12, %13 : vector<32x128xf32>
    %cst_3 = arith.constant dense<0.000000e+00> : vector<128xf32>
    %15 = vector.multi_reduction <add>, %14, %cst_3 [0] : vector<32x128xf32> to vector<128xf32>
    %16 = vector.shape_cast %15 : vector<128xf32> to vector<1x128xf32>
    %17 = vector.broadcast %5 : vector<1x1xf32> to vector<1x128xf32>
    %18 = arith.addf %16, %17 : vector<1x128xf32>
    %c0_4 = arith.constant 0 : index
    %c0_5 = arith.constant 0 : index
    %19 = vector.load %arg2[%c0_4, %c0_5] : memref<1x128xf32, #tpu.memory_space<vmem>>, vector<1x128xf32>
    tpu.vector_store %arg2[%c0_4, %c0_5], %18 {strides = array<i32>} : memref<1x128xf32, #tpu.memory_space<vmem>>, vector<1x128xf32>,
    return
  }
}

</mosaic_0001>

<llo_original>
// kernel: tpu_custom_call.1
$region0: #{tpu_custom_call.1}
  #allocation0 [shape = 'u32[]', space=smem, size = 0x4, offset = 0x4, fixed_abs, tag = 'smem constant byte address 0x4 - core index']
  #allocation1 [shape = 'u32[144,128]{1,0:T(1,128)}', space=vmem, size = 0x12000, scoped, tag = 'internal scratch']
  %s0 = inlined_call_operand.vmem [shape: f32[1,128], index: 0, kind: input, shape index: {}]
  %s1 = inlined_call_operand.vmem [shape: f32[32,4], index: 1, kind: input, shape index: {}]
  %s2 = inlined_call_operand.hbm [shape: f32[1,128], index: 2, kind: output, shape index: {}]
  %s3 = sld [smem:[#allocation0]]
  $region18: #{tpu_custom_call.1} parent=0
    _
  %s5 = ssub.s32 1, %s3
  %s6 = scalar_select 0, %s5, %s3
  $region1: #{tpu_custom_call.1} parent=0
    #allocation2 [shape = 'u8[512]{0}', space=vmem, size = 0x400, scoped, tag = 'output window, operand 0, single buffered']
    #allocation3 [shape = 's32[1]{0}', space=sflag, size = 0x4, scoped, tag = 'scoped memory for tpu_custom_call.1']
    %7 = vsyncpa [#allocation3], 0
    // Predicated region
    $region2: #{tpu_custom_call.1} parent=1 // pred_check
      _
    $region3: #{tpu_custom_call.1} parent=1 // pred_check_branch
      %9 = sbr.rel (0) target = $region5
    $region4: #{tpu_custom_call.1} parent=1 // pred_region
      _
    $region5: #{tpu_custom_call.1} parent=1 // pred_fallthru
      _
    // Predicated region
    $region6: #{tpu_custom_call.1} parent=1 // pred_check
      _
    $region7: #{tpu_custom_call.1} parent=1 // pred_check_branch
      %11 = sbr.rel (0) target = $region9
    $region8: #{tpu_custom_call.1} parent=1 // pred_region
      _
    $region9: #{tpu_custom_call.1} parent=1 // pred_fallthru
      _
    %v12 = vld [vmem:[%s0] sm:$0x1]
    %v13 = vld [vmem:[%s1] sm:$0xff]
    %v14 = vld [vmem:[%s1 + $0x8] sm:$0xff]
    %v15 = vld [vmem:[%s1 + $0x10] sm:$0xff]
    %v16 = vld [vmem:[%s1 + $0x18] sm:$0xff]
    %18 = vset.pattern.permute.xlu0 0
    %19 = vperm.xlu0 %18, %v13
    %v20 = vpop.permute.xlu0 %19
    %23 = vset.pattern.permute.xlu0 0
    %24 = vperm.xlu0 %23, %v14
    %v25 = vpop.permute.xlu0 %24
    %28 = vset.pattern.permute.xlu0 0
    %29 = vperm.xlu0 %28, %v15
    %v30 = vpop.permute.xlu0 %29
    %33 = vset.pattern.permute.xlu0 0
    %34 = vperm.xlu0 %33, %v16
    %v35 = vpop.permute.xlu0 %34
    %v38 = vlaneseq
    %v39 = vshrl.u32 %v38, 7
    %v40 = vsub.s32 0, %v39
    %v41 = vrot.slane %v12, %v40
    %v43 = vmul.f32 %v20, %v41
    %v44 = vmul.f32 %v25, %v41
    %v45 = vmul.f32 %v30, %v41
    %v46 = vmul.f32 %v35, %v41
    %47 = vset.pattern.permute.xlu0 1
    %48 = vperm.xlu0 %47, %v13
    %v49 = vpop.permute.xlu0 %48
    %51 = vset.pattern.permute.xlu0 1
    %52 = vperm.xlu0 %51, %v14
    %v53 = vpop.permute.xlu0 %52
    %55 = vset.pattern.permute.xlu0 1
    %56 = vperm.xlu0 %55, %v15
    %v57 = vpop.permute.xlu0 %56
    %59 = vset.pattern.permute.xlu0 1
    %60 = vperm.xlu0 %59, %v16
    %v61 = vpop.permute.xlu0 %60
    %v63 = vadd.f32 %v43, %v49
    %v64 = vadd.f32 %v44, %v53
    %v65 = vadd.f32 %v45, %v57
    %v66 = vadd.f32 %v46, %v61
    %v67 = vmax.f32 %v63, 0.0
    %v68 = vmax.f32 %v64, 0.0
    %v69 = vmax.f32 %v65, 0.0
    %v70 = vmax.f32 %v66, 0.0
    %71 = vset.pattern.permute.xlu0 2
    %72 = vperm.xlu0 %71, %v13
    %v73 = vpop.permute.xlu0 %72
    %75 = vset.pattern.permute.xlu0 2
    %76 = vperm.xlu0 %75, %v14
    %v77 = vpop.permute.xlu0 %76
    %79 = vset.pattern.permute.xlu0 2
    %80 = vperm.xlu0 %79, %v15
    %v81 = vpop.permute.xlu0 %80
    %83 = vset.pattern.permute.xlu0 2
    %84 = vperm.xlu0 %83, %v16
    %v85 = vpop.permute.xlu0 %84
    %v87 = vmul.f32 %v67, %v73
    %v88 = vmul.f32 %v68, %v77
    %v89 = vmul.f32 %v69, %v81
    %v90 = vmul.f32 %v70, %v85
    %v91 = vadd.f32 %v87, %v88
    %v92 = vadd.f32 %v91, %v89
    %v93 = vadd.f32 %v92, %v90
    %v94 = vrot.slane %v93, 4
    %v95 = vadd.f32 %v93, %v94
    %v96 = vrot.slane %v95, 2
    %v97 = vadd.f32 %v95, %v96
    %v98 = vrot.slane %v97, 1
    %v99 = vadd.f32 %v97, %v98
    %100 = vset.pattern.permute.xlu0 3
    %101 = vperm.xlu0 %100, %v13
    %v102 = vpop.permute.xlu0 %101
    %v104 = vadd.f32 %v99, %v102
    %105 = vst [vmem:[#allocation2] sm:$0x1] %v104
    // Predicated region
    $region10: #{tpu_custom_call.1} parent=1 // pred_check
      _
    $region11: #{tpu_custom_call.1} parent=1 // pred_check_branch
      %107 = sbr.rel (0) target = $region13
    $region12: #{tpu_custom_call.1} parent=1 // pred_region
      %s109 = ssub.s32 16, 16
      %110 = vsyncadd [#allocation3], %s109
      %s112 = sshll.u32 [#allocation2], 4
      %s113 = int_to_ptr.vmem [resolvable:$true] %s112
      %115 = dma.vmem_to_hbm [thread:$0]  %s113, 16, %s2, [#allocation3]
    $region13: #{tpu_custom_call.1} parent=1 // pred_fallthru
      _
    // Predicated region
    $region14: #{tpu_custom_call.1} parent=1 // pred_check
      _
    $region15: #{tpu_custom_call.1} parent=1 // pred_check_branch
      %117 = sbr.rel (0) target = $region17
    $region16: #{tpu_custom_call.1} parent=1 // pred_region
      %118 = dma.done [#allocation3], 16
    $region17: #{tpu_custom_call.1} parent=1 // pred_fallthru
      _
    %119 = vsyncpa [#allocation3], 1

</llo_original>
